<compile_context>
chip_gen: v6e
topology: v6e:2x2x1
jax: 0.10.0
libtpu: 0.0.40
codegen_flags: <defaults>
</compile_context>

<pallas_src>
import jax
import jax.numpy as jnp
from jax.experimental import pallas as pl
from jax.experimental.pallas import tpu as pltpu


def _copy_kernel(x_ref, o_ref):
    # Single ref-to-ref assignment: one DMA in, one DMA out per tile.
    o_ref[...] = x_ref[...]


def empty_sine_embellisher_forward(sine: int, embed: jax.Array) -> jax.Array:
    """Pallas-free fast path.

    EmptySineEmbellisher.forward is a pure identity, so the optimal TPU
    implementation is to return `embed` unchanged (free under jit).
    """
    del sine  # unused, mirroring the reference module
    return embed


def empty_sine_embellisher_pallas(sine: int, embed: jax.Array) -> jax.Array:
    """Optional Pallas boundary: identity implemented as a tiled VMEM copy.

    Only useful if an explicit kernel/fusion boundary is desired; otherwise
    prefer `empty_sine_embellisher_forward`.
    """
    del sine  # unused, mirroring the reference module

    orig_shape = embed.shape
    n = embed.size
    itemsize = jnp.dtype(embed.dtype).itemsize

    # Wrapper-side reshape to a lane-dense 2D slab (last dim = 128) when
    # possible, so the kernel issues unmasked full-lane stores.
    if n % 128 == 0 and n >= 128:
        lane = 128
        rows = n // 128
    else:
        lane = n
        rows = 1
    x2d = embed.reshape(rows, lane)

    # ~2 MiB per block -> (input + output) x double-buffering stays well under
    # the 16 MiB v5e default scoped VMEM limit (and v7x's smaller 64 MiB VMEM),
    # while blocks stay large enough (>=512 rows for f32) to sit near the
    # measured HBM-bandwidth roofline.
    target_bytes = 2 * 1024 * 1024
    block_rows = max(1, min(rows, target_bytes // max(1, lane * itemsize)))
    if rows >= 8:
        # Keep the sublane dimension a multiple of 8 for clean (8,128) tiling.
        block_rows = max(8, (block_rows // 8) * 8)
    grid = (pl.cdiv(rows, block_rows),)

    out2d = pl.pallas_call(
        _copy_kernel,
        out_shape=jax.ShapeDtypeStruct((rows, lane), embed.dtype),
        grid=grid,
        in_specs=[pl.BlockSpec((block_rows, lane), lambda i: (i, 0))],
        out_specs=pl.BlockSpec((block_rows, lane), lambda i: (i, 0)),
        compiler_params=pltpu.CompilerParams(
            # Row tiles are independent -> both v7x TensorCores can split the
            # copy; harmless on single-TC v5e/v6e.
            dimension_semantics=("parallel",),
        ),
        cost_estimate=pl.CostEstimate(
            flops=0,
            transcendentals=0,
            bytes_accessed=2 * n * itemsize,
        ),
    )(x2d)
    return out2d.reshape(orig_shape)


class EmptySineEmbellisher:
    """Thin JAX-side wrapper mirroring the PyTorch module."""

    def __init__(self, dim: int, use_pallas_boundary: bool = False):
        self.dim = dim
        self.use_pallas_boundary = use_pallas_boundary

    def __call__(self, sine: int, embed: jax.Array) -> jax.Array:
        if self.use_pallas_boundary:
            return empty_sine_embellisher_pallas(sine, embed)
        return empty_sine_embellisher_forward(sine, embed)


if __name__ == "__main__":
    # Small, lane-dense example: batch=8 (full sublanes), dim=128 (full lanes).
    dim = 128
    batch = 8
    key = jax.random.PRNGKey(0)

    embed = jax.random.normal(key, (batch, dim), dtype=jnp.float32)
    # Reference regenerated from the same key so the check is independent of
    # any buffer reuse performed by either path.
    expected = jax.random.normal(key, (batch, dim), dtype=jnp.float32)

    # Fast path (the real optimization): pure identity, no pallas_call.
    fast_module = EmptySineEmbellisher(dim)
    out_fast = jax.block_until_ready(fast_module(3, embed))  # sine=3 ignored

    # Pallas boundary path: run the tiled copy kernel once.
    pallas_module = EmptySineEmbellisher(dim, use_pallas_boundary=True)
    out_pallas = jax.block_until_ready(pallas_module(3, embed))

    for out in (out_fast, out_pallas):
        assert out.shape == (batch, dim)
        assert out.dtype == jnp.float32
        assert jnp.array_equal(out, expected)

    print("KERNEL_OK")
</pallas_src>

<mosaic_0001>
module attributes {stable_mosaic.version = 11 : i64} {
  func.func @_copy_kernel(%arg0: i32, %arg1: memref<8x128xf32, #tpu.memory_space<vmem>>, %arg2: memref<8x128xf32, #tpu.memory_space<vmem>>) attributes {dimension_semantics = [#tpu.dimension_semantics<parallel>], iteration_bounds = array<i64: 1>, scalar_prefetch = 0 : i64, scratch_operands = 0 : i64, tpu.core_type = #tpu.core_type<tc>, window_params = [{transform_indices = @transform_0, window_bounds = array<i64: 8, 128>}, {transform_indices = @transform_1, window_bounds = array<i64: 8, 128>}]} {
    %c0 = arith.constant 0 : index
    %c0_0 = arith.constant 0 : index
    %0 = vector.load %arg1[%c0, %c0_0] : memref<8x128xf32, #tpu.memory_space<vmem>>, vector<8x128xf32>
    %c0_1 = arith.constant 0 : index
    %c0_2 = arith.constant 0 : index
    %1 = vector.load %arg2[%c0_1, %c0_2] : memref<8x128xf32, #tpu.memory_space<vmem>>, vector<8x128xf32>
    tpu.vector_store %arg2[%c0_1, %c0_2], %0 {strides = array<i32>} : memref<8x128xf32, #tpu.memory_space<vmem>>, vector<8x128xf32>,
    return
  }
  func.func @transform_0(%arg0: i32) -> (i32, i32) {
    %c0_i32 = arith.constant 0 : i32
    %c0_i32_0 = arith.constant 0 : i32
    return %arg0, %c0_i32 : i32, i32
  }
  func.func @transform_1(%arg0: i32) -> (i32, i32) {
    %c0_i32 = arith.constant 0 : i32
    %c0_i32_0 = arith.constant 0 : i32
    return %arg0, %c0_i32 : i32, i32
  }
}

</mosaic_0001>

<llo_original>
// kernel: tpu_custom_call.1
$region0: #{tpu_custom_call.1}
  #allocation0 [shape = 'u32[]', space=smem, size = 0x4, offset = 0x4, fixed_abs, tag = 'smem constant byte address 0x4 - core index']
  #allocation1 [shape = 'u32[144,128]{1,0:T(1,128)}', space=vmem, size = 0x12000, scoped, tag = 'internal scratch']
  %s0 = inlined_call_operand.hbm [shape: f32[8,128], index: 0, kind: input, shape index: {}]
  %s1 = inlined_call_operand.hbm [shape: f32[8,128], index: 1, kind: output, shape index: {}]
  %s2 = sld [smem:[#allocation0]]
  $region18: #{tpu_custom_call.1} parent=0
    _
  %s4 = ssub.s32 1, %s2
  %s5 = scalar_select 0, %s4, %s2
  $region1: #{tpu_custom_call.1} parent=0
    #allocation2 [shape = 'u8[4096]{0}', space=vmem, size = 0x1000, scoped, tag = 'input window, operand 0, single buffered']
    #allocation3 [shape = 's32[1]{0}', space=sflag, size = 0x4, scoped, tag = 'scoped memory for tpu_custom_call.1']
    #allocation4 [shape = 's32[1]{0}', space=sflag, size = 0x4, scoped, tag = 'scoped memory for tpu_custom_call.1']
    #allocation5 [shape = 'u8[4096]{0}', space=vmem, size = 0x1000, scoped, tag = 'output window, operand 0, single buffered']
    %6 = vsyncpa [#allocation3], 0
    %7 = vsyncpa [#allocation4], 0
    // Predicated region
    $region2: #{tpu_custom_call.1} parent=1 // pred_check
      _
    $region3: #{tpu_custom_call.1} parent=1 // pred_check_branch
      %9 = sbr.rel (0) target = $region5
    $region4: #{tpu_custom_call.1} parent=1 // pred_region
      %s11 = ssub.s32 128, 128
      %12 = vsyncadd [#allocation3], %s11
      %s14 = sshll.u32 [#allocation2], 4
      %s15 = int_to_ptr.vmem [resolvable:$true] %s14
      %17 = dma.hbm_to_vmem [thread:$0]  %s0, 128, %s15, [#allocation3]
    $region5: #{tpu_custom_call.1} parent=1 // pred_fallthru
      _
    // Predicated region
    $region6: #{tpu_custom_call.1} parent=1 // pred_check
      _
    $region7: #{tpu_custom_call.1} parent=1 // pred_check_branch
      %19 = sbr.rel (0) target = $region9
    $region8: #{tpu_custom_call.1} parent=1 // pred_region
      %20 = dma.done [#allocation3], 128
    $region9: #{tpu_custom_call.1} parent=1 // pred_fallthru
      _
    %v21 = vld [vmem:[#allocation2] sm:$0xff]
    %22 = vst [vmem:[#allocation5] sm:$0xff] %v21
    // Predicated region
    $region10: #{tpu_custom_call.1} parent=1 // pred_check
      _
    $region11: #{tpu_custom_call.1} parent=1 // pred_check_branch
      %24 = sbr.rel (0) target = $region13
    $region12: #{tpu_custom_call.1} parent=1 // pred_region
      %s26 = ssub.s32 128, 128
      %27 = vsyncadd [#allocation4], %s26
      %s29 = sshll.u32 [#allocation5], 4
      %s30 = int_to_ptr.vmem [resolvable:$true] %s29
      %32 = dma.vmem_to_hbm [thread:$0]  %s30, 128, %s1, [#allocation4]
    $region13: #{tpu_custom_call.1} parent=1 // pred_fallthru
      _
    // Predicated region
    $region14: #{tpu_custom_call.1} parent=1 // pred_check
      _
    $region15: #{tpu_custom_call.1} parent=1 // pred_check_branch
      %34 = sbr.rel (0) target = $region17
    $region16: #{tpu_custom_call.1} parent=1 // pred_region
      %35 = dma.done [#allocation4], 128
    $region17: #{tpu_custom_call.1} parent=1 // pred_fallthru
      _
    %36 = vsyncpa [#allocation3], 1
    %37 = vsyncpa [#allocation4], 1

</llo_original>
